<compile_context>
chip_gen: v6e
topology: v6e:2x2x1
jax: 0.10.0
libtpu: 0.0.40
codegen_flags: <defaults>
</compile_context>

<pallas_src>
import functools

import jax
import jax.numpy as jnp
from jax.experimental import pallas as pl
from jax.experimental.pallas import tpu as pltpu

LN_EPS = 1e-5  # nn.LayerNorm default


def _round_up(x, m):
    return (x + m - 1) // m * m


def _choose_token_tile(hw, batch, block_m):
    """Largest 128-aligned token tile <= block_m with minimal per-batch padding."""
    cap = max(128, min(_round_up(block_m, 128), _round_up(hw, 128)))
    best, best_pad = cap, _round_up(hw, cap) - hw
    t = cap - 128
    while t >= 256:
        pad = _round_up(hw, t) - hw
        if pad < best_pad:           # strict < : prefer the largest tile among ties
            best, best_pad = t, pad
        t -= 128
    tm = best
    # v7x shards "parallel" grid axes over 2 TensorCores: keep >= 2 grid steps.
    while batch * (_round_up(hw, tm) // tm) < 2 and tm > 128:
        tm = max(128, _round_up(tm // 2, 128))
    return tm


def _conv_embed_kernel(patches_ref, w_ref, params_ref, out_ref, *, n_true):
    # patches_ref: (tm, K)   compute dtype (bf16 / f32)
    # w_ref:       (K, Np)   compute dtype; columns >= n_true are zero
    # params_ref:  (4, Np)   f32: rows = [conv bias; ln gamma; ln beta; valid-col mask]
    # out_ref:     (n_true, tm)  output dtype (channel-major, lane-dense store)
    acc = jnp.dot(patches_ref[...], w_ref[...],
                  preferred_element_type=jnp.float32)          # (tm, Np) f32
    acc = acc + params_ref[0:1, :]                              # conv bias (0 in pad)

    # LayerNorm over the true embed_dim, in f32. Padded columns hold exact zeros;
    # the mask row keeps them out of the variance.
    mask = params_ref[3:4, :]
    inv_n = 1.0 / n_true
    mean = jnp.sum(acc * mask, axis=-1, keepdims=True) * inv_n
    diff = (acc - mean) * mask
    var = jnp.sum(diff * diff, axis=-1, keepdims=True) * inv_n
    normed = diff * jax.lax.rsqrt(var + LN_EPS)
    y = normed * params_ref[1:2, :] + params_ref[2:3, :]        # (tm, Np) f32

    # XLU transpose (both dims 128-aligned), drop pad channels, lane-dense store.
    y_t = y.T                                                   # (Np, tm)
    out_ref[...] = y_t[:n_true, :].astype(out_ref.dtype)


def _extract_patch_tokens(x, kh, kw, stride, padding):
    """NCHW -> (B, Hout*Wout, Cin*kh*kw) patches, feature order (Cin, kh, kw)."""
    B, C, _, _ = x.shape
    x_nhwc = jnp.transpose(x, (0, 2, 3, 1))          # small, input-sized transpose
    patches = jax.lax.conv_general_dilated_patches(
        x_nhwc,
        filter_shape=(kh, kw),
        window_strides=(stride, stride),
        padding=((padding, padding), (padding, padding)),
        dimension_numbers=("NHWC", "HWIO", "NHWC"),
        precision=jax.lax.Precision.HIGHEST,          # pure gather; keep values exact
    )  # (B, Hout, Wout, Cin*kh*kw); feature dim is channel-major => (Cin, kh, kw)
    Hout, Wout = patches.shape[1], patches.shape[2]
    return patches.reshape(B, Hout * Wout, C * kh * kw), Hout, Wout


@functools.partial(
    jax.jit,
    static_argnames=("stride", "padding", "compute_dtype", "out_dtype", "block_m"),
)
def conv_embed(x, weight, bias, gamma, beta, *, stride, padding,
               compute_dtype=jnp.bfloat16, out_dtype=None, block_m=2048):
    """x: (B, Cin, H, W); weight: (embed_dim, Cin, kh, kw).

    Returns (B, embed_dim, Hout, Wout) in `out_dtype` (default: compute_dtype, i.e.
    bf16 on the production path, f32 on the f32 validation path).
    """
    if out_dtype is None:
        out_dtype = compute_dtype
    B = x.shape[0]
    N, cin, kh, kw = weight.shape
    Np = _round_up(N, 128)                            # lane-aligned channel padding

    # Cast BEFORE im2col so the patch matrix is written at compute precision.
    patches, Hout, Wout = _extract_patch_tokens(x.astype(compute_dtype),
                                                kh, kw, stride, padding)
    HW = Hout * Wout
    K = cin * kh * kw

    tm = _choose_token_tile(HW, B, block_m)
    HWp = _round_up(HW, tm)
    if HWp != HW:
        patches = jnp.pad(patches, ((0, 0), (0, HWp - HW), (0, 0)))

    # PyTorch conv weight (out, in, kh, kw) -> (K, Np) with (in, kh, kw) flattened.
    w_mat = weight.reshape(N, K).T.astype(compute_dtype)
    if Np != N:
        w_mat = jnp.pad(w_mat, ((0, 0), (0, Np - N)))

    # Pack bias / gamma / beta / valid-column mask into one resident (4, Np) operand.
    def _pad_n(v):
        v = v.astype(jnp.float32)
        return jnp.pad(v, (0, Np - N)) if Np != N else v
    params = jnp.stack([_pad_n(bias), _pad_n(gamma), _pad_n(beta),
                        _pad_n(jnp.ones((N,), jnp.float32))])

    # VMEM limit from the actual double-buffered footprint (2x headroom, 48 MiB cap
    # so we never request all of v7x's 64 MiB; >= 32 MiB covers v5e's 16 MiB default).
    cbytes = jnp.dtype(compute_dtype).itemsize
    obytes = jnp.dtype(out_dtype).itemsize
    tile_bytes = (2 * tm * K * cbytes          # double-buffered patch tiles
                  + 2 * N * tm * obytes        # double-buffered output tiles
                  + 2 * K * Np * cbytes        # resident weight
                  + 2 * 4 * Np * 4)            # resident params
    vmem_limit = int(min(max(2 * tile_bytes, 32 * 1024 * 1024), 48 * 1024 * 1024))

    kernel = functools.partial(_conv_embed_kernel, n_true=N)
    out = pl.pallas_call(
        kernel,
        out_shape=jax.ShapeDtypeStruct((B, N, HWp), out_dtype),
        grid_spec=pltpu.PrefetchScalarGridSpec(
            num_scalar_prefetch=0,
            grid=(B, HWp // tm),
            in_specs=[
                pl.BlockSpec((None, tm, K), lambda b, i: (b, i, 0)),   # streamed tokens
                pl.BlockSpec((K, Np), lambda b, i: (0, 0)),            # weight, resident
                pl.BlockSpec((4, Np), lambda b, i: (0, 0)),            # params, resident
            ],
            out_specs=pl.BlockSpec((None, N, tm), lambda b, i: (b, 0, i)),
        ),
        compiler_params=pltpu.CompilerParams(
            dimension_semantics=("parallel", "parallel"),
            vmem_limit_bytes=vmem_limit,
        ),
    )(patches, w_mat, params)                         # (B, N, HWp), channel-major

    if HWp != HW:
        out = out[:, :, :HW]
    return out.reshape(B, N, Hout, Wout)              # free reshape, no transpose


def _reference(x, weight, bias, gamma, beta, stride, padding):
    """Pure-JAX reference (lax conv + layernorm) for a correctness check."""
    y = jax.lax.conv_general_dilated(
        x, weight, window_strides=(stride, stride),
        padding=((padding, padding), (padding, padding)),
        dimension_numbers=("NCHW", "OIHW", "NCHW"),
        precision=jax.lax.Precision.HIGHEST,
    ) + bias[None, :, None, None]
    t = y.transpose(0, 2, 3, 1)                       # b h w c
    mean = t.mean(-1, keepdims=True)
    var = ((t - mean) ** 2).mean(-1, keepdims=True)
    t = (t - mean) / jnp.sqrt(var + LN_EPS) * gamma + beta
    return t.transpose(0, 3, 1, 2)


if __name__ == "__main__":
    # Small shapes consistent with ConvEmbed defaults:
    # patch_size=7, in_chans=3, embed_dim=64, stride=4, padding=2.
    B, Cin, H, W = 2, 3, 16, 16
    embed_dim, patch, stride, padding = 64, 7, 4, 2

    key = jax.random.PRNGKey(0)
    kx, kw_, kb, kg, kbt = jax.random.split(key, 5)
    x = jax.random.normal(kx, (B, Cin, H, W), dtype=jnp.float32)
    weight = jax.random.normal(kw_, (embed_dim, Cin, patch, patch), dtype=jnp.float32) * 0.05
    bias = jax.random.normal(kb, (embed_dim,), dtype=jnp.float32) * 0.1
    gamma = 1.0 + 0.1 * jax.random.normal(kg, (embed_dim,), dtype=jnp.float32)
    beta = 0.1 * jax.random.normal(kbt, (embed_dim,), dtype=jnp.float32)

    Hout = Wout = (H + 2 * padding - patch) // stride + 1
    ref = _reference(x, weight, bias, gamma, beta, stride, padding)

    # f32 compute path: tight numerical check against the conv + LayerNorm reference
    # (also a regression test for the (Cin,kh,kw) patch ordering and ragged-K dot).
    out_f32 = conv_embed(x, weight, bias, gamma, beta, stride=stride, padding=padding,
                         compute_dtype=jnp.float32)
    out_f32 = jax.block_until_ready(out_f32)
    assert out_f32.shape == (B, embed_dim, Hout, Wout), out_f32.shape
    assert jnp.allclose(out_f32, ref, atol=1e-4, rtol=1e-4)

    # Production path: bf16 patches/weights/output, f32 accumulation & LN math.
    out_bf16 = conv_embed(x, weight, bias, gamma, beta, stride=stride, padding=padding)
    out_bf16 = jax.block_until_ready(out_bf16)
    assert out_bf16.shape == (B, embed_dim, Hout, Wout), out_bf16.shape
    assert out_bf16.dtype == jnp.bfloat16, out_bf16.dtype
    assert jnp.allclose(out_bf16.astype(jnp.float32), ref, atol=5e-2, rtol=5e-2)

    print("KERNEL_OK")
</pallas_src>

<mosaic_0001>
module attributes {stable_mosaic.version = 11 : i64} {
  func.func @_conv_embed_kernel(%arg0: i32, %arg1: i32, %arg2: memref<1x128x147xf32, #tpu.memory_space<vmem>>, %arg3: memref<147x128xf32, #tpu.memory_space<vmem>>, %arg4: memref<4x128xf32, #tpu.memory_space<vmem>>, %arg5: memref<1x64x128xf32, #tpu.memory_space<vmem>>) attributes {dimension_semantics = [#tpu.dimension_semantics<parallel>, #tpu.dimension_semantics<parallel>], iteration_bounds = array<i64: 2, 1>, scalar_prefetch = 0 : i64, scratch_operands = 0 : i64, tpu.core_type = #tpu.core_type<tc>, window_params = [{transform_indices = @transform_0, window_bounds = array<i64: 1, 128, 147>}, {pipeline_mode = #tpu.pipeline_mode<synchronous>, transform_indices = @transform_1, window_bounds = array<i64: 147, 128>}, {pipeline_mode = #tpu.pipeline_mode<synchronous>, transform_indices = @transform_2, window_bounds = array<i64: 4, 128>}, {transform_indices = @transform_3, window_bounds = array<i64: 1, 64, 128>}]} {
    %c0 = arith.constant 0 : index
    %c0_0 = arith.constant 0 : index
    %c0_1 = arith.constant 0 : index
    %0 = vector.load %arg2[%c0, %c0_0, %c0_1] : memref<1x128x147xf32, #tpu.memory_space<vmem>>, vector<1x128x147xf32>
    %1 = vector.shape_cast %0 : vector<1x128x147xf32> to vector<128x147xf32>
    %c0_2 = arith.constant 0 : index
    %c0_3 = arith.constant 0 : index
    %2 = vector.load %arg3[%c0_2, %c0_3] : memref<147x128xf32, #tpu.memory_space<vmem>>, vector<147x128xf32>
    %cst = arith.constant dense<0.000000e+00> : vector<128x128xf32>
    %3 = tpu.matmul %1, %2, %cst {dimension_numbers = #tpu.dot_dimension_numbers<[1], [0], [0], [1], [0, 0, 1, 1], [], []>} : vector<128x147xf32>, vector<147x128xf32>, vector<128x128xf32> -> vector<128x128xf32>
    %c0_4 = arith.constant 0 : index
    %c0_5 = arith.constant 0 : index
    %4 = vector.load %arg4[%c0_4, %c0_5] : memref<4x128xf32, #tpu.memory_space<vmem>>, vector<1x128xf32>
    %5 = vector.broadcast %4 : vector<1x128xf32> to vector<128x128xf32>
    %6 = arith.addf %3, %5 : vector<128x128xf32>
    %c3 = arith.constant 3 : index
    %c0_6 = arith.constant 0 : index
    %7 = vector.load %arg4[%c3, %c0_6] : memref<4x128xf32, #tpu.memory_space<vmem>>, vector<1x128xf32>
    %8 = vector.broadcast %7 : vector<1x128xf32> to vector<128x128xf32>
    %9 = arith.mulf %6, %8 : vector<128x128xf32>
    %cst_7 = arith.constant dense<0.000000e+00> : vector<128xf32>
    %10 = vector.multi_reduction <add>, %9, %cst_7 [1] : vector<128x128xf32> to vector<128xf32>
    %11 = vector.shape_cast %10 : vector<128xf32> to vector<128x1xf32>
    %cst_8 = arith.constant 1.562500e-02 : f32
    %12 = vector.broadcast %cst_8 : f32 to vector<128x1xf32>
    %13 = arith.mulf %11, %12 : vector<128x1xf32>
    %14 = vector.broadcast %13 : vector<128x1xf32> to vector<128x128xf32>
    %15 = arith.subf %6, %14 : vector<128x128xf32>
    %16 = vector.broadcast %7 : vector<1x128xf32> to vector<128x128xf32>
    %17 = arith.mulf %15, %16 : vector<128x128xf32>
    %18 = arith.mulf %17, %17 : vector<128x128xf32>
    %cst_9 = arith.constant dense<0.000000e+00> : vector<128xf32>
    %19 = vector.multi_reduction <add>, %18, %cst_9 [1] : vector<128x128xf32> to vector<128xf32>
    %20 = vector.shape_cast %19 : vector<128xf32> to vector<128x1xf32>
    %cst_10 = arith.constant 1.562500e-02 : f32
    %21 = vector.broadcast %cst_10 : f32 to vector<128x1xf32>
    %22 = arith.mulf %20, %21 : vector<128x1xf32>
    %cst_11 = arith.constant 9.99999974E-6 : f32
    %23 = vector.broadcast %cst_11 : f32 to vector<128x1xf32>
    %24 = arith.addf %22, %23 : vector<128x1xf32>
    %25 = math.rsqrt %24 : vector<128x1xf32>
    %26 = vector.broadcast %25 : vector<128x1xf32> to vector<128x128xf32>
    %27 = arith.mulf %17, %26 : vector<128x128xf32>
    %c1 = arith.constant 1 : index
    %c0_12 = arith.constant 0 : index
    %28 = vector.load %arg4[%c1, %c0_12] : memref<4x128xf32, #tpu.memory_space<vmem>>, vector<1x128xf32>
    %29 = vector.broadcast %28 : vector<1x128xf32> to vector<128x128xf32>
    %30 = arith.mulf %27, %29 : vector<128x128xf32>
    %c2 = arith.constant 2 : index
    %c0_13 = arith.constant 0 : index
    %31 = vector.load %arg4[%c2, %c0_13] : memref<4x128xf32, #tpu.memory_space<vmem>>, vector<1x128xf32>
    %32 = vector.broadcast %31 : vector<1x128xf32> to vector<128x128xf32>
    %33 = arith.addf %30, %32 : vector<128x128xf32>
    %34 = tpu.transpose %33, [1, 0] : vector<128x128xf32> -> vector<128x128xf32>
    %35 = vector.extract_strided_slice %34 {offsets = [0, 0], sizes = [64, 128], strides = [1, 1]} : vector<128x128xf32> to vector<64x128xf32>
    %c0_14 = arith.constant 0 : index
    %c0_15 = arith.constant 0 : index
    %c0_16 = arith.constant 0 : index
    %36 = vector.load %arg5[%c0_14, %c0_15, %c0_16] : memref<1x64x128xf32, #tpu.memory_space<vmem>>, vector<1x64x128xf32>
    %37 = vector.shape_cast %36 : vector<1x64x128xf32> to vector<64x128xf32>
    %38 = vector.shape_cast %35 : vector<64x128xf32> to vector<1x64x128xf32>
    tpu.vector_store %arg5[%c0_14, %c0_15, %c0_16], %38 {strides = array<i32>} : memref<1x64x128xf32, #tpu.memory_space<vmem>>, vector<1x64x128xf32>,
    return
  }
  func.func @transform_0(%arg0: i32, %arg1: i32) -> (i32, i32, i32) {
    %c0_i32 = arith.constant 0 : i32
    %c0_i32_0 = arith.constant 0 : i32
    return %arg0, %arg1, %c0_i32 : i32, i32, i32
  }
  func.func @transform_1(%arg0: i32, %arg1: i32) -> (i32, i32) {
    %c0_i32 = arith.constant 0 : i32
    %c0_i32_0 = arith.constant 0 : i32
    %c0_i32_1 = arith.constant 0 : i32
    return %c0_i32, %c0_i32_0 : i32, i32
  }
  func.func @transform_2(%arg0: i32, %arg1: i32) -> (i32, i32) {
    %c0_i32 = arith.constant 0 : i32
    %c0_i32_0 = arith.constant 0 : i32
    %c0_i32_1 = arith.constant 0 : i32
    return %c0_i32, %c0_i32_0 : i32, i32
  }
  func.func @transform_3(%arg0: i32, %arg1: i32) -> (i32, i32, i32) {
    %c0_i32 = arith.constant 0 : i32
    %c0_i32_0 = arith.constant 0 : i32
    return %arg0, %c0_i32, %arg1 : i32, i32, i32
  }
}

</mosaic_0001>

<llo_original>
// kernel: conv_embed.1
$region0: #{conv_embed.1}
  #allocation0 [shape = 'u32[]', space=smem, size = 0x4, offset = 0x4, fixed_abs, tag = 'smem constant byte address 0x4 - core index']
  #allocation1 [shape = 'u32[144,128]{1,0:T(1,128)}', space=vmem, size = 0x12000, scoped, tag = 'internal scratch']
  %s0 = inlined_call_operand.vmem [shape: f32[2,128,147], index: 0, kind: input, shape index: {}]
  %s1 = inlined_call_operand.vmem [shape: f32[147,128], index: 1, kind: input, shape index: {}]
  %s2 = inlined_call_operand.vmem [shape: f32[4,128], index: 2, kind: input, shape index: {}]
  %s3 = inlined_call_operand.vmem [shape: f32[2,64,128], index: 3, kind: output, shape index: {}]
  %s4 = sld [smem:[#allocation0]]
  $region45: #{conv_embed.1} parent=0
    _
  %s6 = ssub.s32 1, %s4
  %s7 = scalar_select 0, %s6, %s4
  loop: start=0, step=1, limit=4
  $region2: #{conv_embed.1} parent=0 // loop_pre_header
    _
  $region3: #{conv_embed.1} parent=0 // loop_header
    %s9 = sphi 0, %s13
    %p10 = scmp.ge.s32.totalorder %s9, 4
    %s16 = sphi 0, %s28
    %s17 = sphi 0, %s24
    %s18 = sphi 0, %s16
    %s19 = sphi 0, %s17
    %s20 = sphi 0, %s18
    %s21 = sphi 0, %s19
    %s33 = sphi 0, %s35
    %s36 = sphi 0, %s33
    %s37 = sphi 0, %s36
    %s53 = sphi 0, %s37
    %s57 = sphi 0, %s57
    %s59 = sphi 0, %s57
    %s60 = sphi 0, %s59
    %s74 = sphi 0, %s60
    %s78 = sphi 0, %s78
    %s80 = sphi 0, %s78
    %s81 = sphi 0, %s80
    %s95 = sphi 0, %s81
    %s103 = sphi 0, %s105
    %s106 = sphi 0, %s103
    %s107 = sphi 0, %s106
    %s123 = sphi 0, %s107
  $region4: #{conv_embed.1} parent=0 // loop_header_branch
    %12 = sbr.rel (%p10) target = $region8
  $region5: #{conv_embed.1} parent=0 // loop_body
    %s14 = ssub.s32 %s9, 1
    %s15 = ssub.s32 %s9, 2
    %s22 = sadd.s32 1, %s17
    %p23 = scmp.ge.s32.totalorder %s22, 1
    %s24 = scalar_select %p23, 0, %s22
    %s25 = sadd.s32 1, %s16
    %s26 = scalar_select %p23, %s25, %s16
    %p27 = scmp.ge.s32.totalorder %s26, 2
    %s28 = scalar_select %p27, 0, %s26
    %s29 = ssub.s32 %s16, %s28
    %s30 = ssub.s32 %s17, %s24
    %s31 = sor.u32 %s29, %s30
    %p32 = scmp.eq.s32.totalorder %s31, 0
    %s34 = sadd.s32 %s33, 1
    %s35 = scalar_select %p32, %s33, %s34
    %p38 = pneg %p32
    %p39 = scmp.eq.s32.totalorder %s9, 1
    %p40 = por %p38, %p39
    %p41 = scmp.ne.s32.totalorder %s33, %s36
    %p42 = scmp.eq.s32.totalorder %s9, 0
    %p43 = por %p41, %p42
    %p44 = scmp.ne.s32.totalorder %s33, %s36
    %p45 = scmp.eq.s32.totalorder %s14, 1
    %p46 = por %p44, %p45
    %p47 = scmp.ne.s32.totalorder %s36, %s37
    %p48 = scmp.eq.s32.totalorder %s14, 0
    %p49 = por %p47, %p48
    %p50 = scmp.ne.s32.totalorder %s36, %s37
    %p51 = scmp.eq.s32.totalorder %s15, 1
    %p52 = por %p50, %p51
    %p54 = scmp.ne.s32.totalorder %s37, %s53
    %p55 = scmp.eq.s32.totalorder %s15, 0
    %p56 = por %p54, %p55
    %s58 = sadd.s32 %s57, 1
    %p61 = scmp.eq.s32.totalorder %s9, 1
    %p62 = scmp.ne.s32.totalorder %s57, %s59
    %p63 = scmp.eq.s32.totalorder %s9, 0
    %p64 = por %p62, %p63
    %p65 = scmp.ne.s32.totalorder %s57, %s59
    %p66 = scmp.eq.s32.totalorder %s14, 1
    %p67 = por %p65, %p66
    %p68 = scmp.ne.s32.totalorder %s59, %s60
    %p69 = scmp.eq.s32.totalorder %s14, 0
    %p70 = por %p68, %p69
    %p71 = scmp.ne.s32.totalorder %s59, %s60
    %p72 = scmp.eq.s32.totalorder %s15, 1
    %p73 = por %p71, %p72
    %p75 = scmp.ne.s32.totalorder %s60, %s74
    %p76 = scmp.eq.s32.totalorder %s15, 0
    %p77 = por %p75, %p76
    %s79 = sadd.s32 %s78, 1
    %p82 = scmp.eq.s32.totalorder %s9, 1
    %p83 = scmp.ne.s32.totalorder %s78, %s80
    %p84 = scmp.eq.s32.totalorder %s9, 0
    %p85 = por %p83, %p84
    %p86 = scmp.ne.s32.totalorder %s78, %s80
    %p87 = scmp.eq.s32.totalorder %s14, 1
    %p88 = por %p86, %p87
    %p89 = scmp.ne.s32.totalorder %s80, %s81
    %p90 = scmp.eq.s32.totalorder %s14, 0
    %p91 = por %p89, %p90
    %p92 = scmp.ne.s32.totalorder %s80, %s81
    %p93 = scmp.eq.s32.totalorder %s15, 1
    %p94 = por %p92, %p93
    %p96 = scmp.ne.s32.totalorder %s81, %s95
    %p97 = scmp.eq.s32.totalorder %s15, 0
    %p98 = por %p96, %p97
    %s99 = ssub.s32 %s16, %s28
    %s100 = ssub.s32 %s17, %s24
    %s101 = sor.u32 %s99, %s100
    %p102 = scmp.eq.s32.totalorder %s101, 0
    %s104 = sadd.s32 %s103, 1
    %s105 = scalar_select %p102, %s103, %s104
    %p108 = pneg %p102
    %p109 = scmp.eq.s32.totalorder %s9, 1
    %p110 = por %p108, %p109
    %p111 = scmp.ne.s32.totalorder %s103, %s106
    %p112 = scmp.eq.s32.totalorder %s9, 0
    %p113 = por %p111, %p112
    %p114 = scmp.ne.s32.totalorder %s103, %s106
    %p115 = scmp.eq.s32.totalorder %s14, 1
    %p116 = por %p114, %p115
    %p117 = scmp.ne.s32.totalorder %s106, %s107
    %p118 = scmp.eq.s32.totalorder %s14, 0
    %p119 = por %p117, %p118
    %p120 = scmp.ne.s32.totalorder %s106, %s107
    %p121 = scmp.eq.s32.totalorder %s15, 1
    %p122 = por %p120, %p121
    %p124 = scmp.ne.s32.totalorder %s107, %s123
    %p125 = scmp.eq.s32.totalorder %s15, 0
    %p126 = por %p124, %p125
    %p127 = scmp.le.s32.totalorder 1, %s9
    %p128 = scmp.lt.s32.totalorder %s9, 3
    %p129 = pnand %p127, %p128
    %p130 = pneg %p129
    // Predicated region
    $region9: #{conv_embed.1} parent=5 // pred_check
      _
    $region10: #{conv_embed.1} parent=5 // pred_check_branch
      %132 = sbr.rel (%p129) target = $region12
    $region11: #{conv_embed.1} parent=5 // pred_region
      %s133 = ssub.s32 %s9, 1
      // Predicated region
      $region13: #{conv_embed.1} parent=11 // pred_check
        %p134 = pneg %p70
      $region14: #{conv_embed.1} parent=11 // pred_check_branch
        %136 = sbr.rel (%p134) target = $region16
      $region15: #{conv_embed.1} parent=11 // pred_region
        _
      $region16: #{conv_embed.1} parent=11 // pred_fallthru
        _
      // Predicated region
      $region17: #{conv_embed.1} parent=11 // pred_check
        %p137 = pneg %p91
      $region18: #{conv_embed.1} parent=11 // pred_check_branch
        %139 = sbr.rel (%p137) target = $region20
      $region19: #{conv_embed.1} parent=11 // pred_region
        _
      $region20: #{conv_embed.1} parent=11 // pred_fallthru
        _
    $region12: #{conv_embed.1} parent=5 // pred_fallthru
      _
    %p140 = scmp.lt.s32.totalorder %s9, 2
    // Predicated region
    $region21: #{conv_embed.1} parent=5 // pred_check
      %p141 = pneg %p140
    $region22: #{conv_embed.1} parent=5 // pred_check_branch
      %143 = sbr.rel (%p141) target = $region24
    $region23: #{conv_embed.1} parent=5 // pred_region
      // Predicated region
      $region25: #{conv_embed.1} parent=23 // pred_check
        %p144 = pneg %p43
      $region26: #{conv_embed.1} parent=23 // pred_check_branch
        %146 = sbr.rel (%p144) target = $region28
      $region27: #{conv_embed.1} parent=23 // pred_region
        %s147 = smul.u32 16, %s17
        %p148 = scmp.lt.s32.totalorder %s16, 1
        %s149 = scalar_select %p148, %s16, 1
        %p150 = scmp.lt.s32.totalorder %s147, 15
        %s151 = scalar_select %p150, %s147, 15
        %s152 = smul.addr %s151, 2
        %s153 = smul.addr %s149, 32
        %s154 = sadd.s32 %s152, %s153
        %s155 = smul.addr %s154, 8
        %s156 = scalar_lea.vmem %s0, %s155
        %s157 = smul.u32 16, %s17
      $region28: #{conv_embed.1} parent=23 // pred_fallthru
        _
    $region24: #{conv_embed.1} parent=5 // pred_fallthru
      _
    %p158 = scmp.le.s32.totalorder 1, %s9
    %p159 = scmp.lt.s32.totalorder %s9, 3
    %p160 = pnand %p158, %p159
    %p161 = pneg %p160
    // Predicated region
    $region29: #{conv_embed.1} parent=5 // pred_check
      _
    $region30: #{conv_embed.1} parent=5 // pred_check_branch
      %163 = sbr.rel (%p160) target = $region32
    $region31: #{conv_embed.1} parent=5 // pred_region
      %s164 = ssub.s32 %s9, 1
      %s165 = smul.u32 16, %s19
      %p166 = scmp.lt.s32.totalorder %s18, 1
      %s167 = scalar_select %p166, %s18, 1
      %p168 = scmp.lt.s32.totalorder %s165, 15
      %s169 = scalar_select %p168, %s165, 15
      %s170 = smul.addr %s169, 2
      %s171 = smul.addr %s167, 32
      %s172 = sadd.s32 %s170, %s171
      %s173 = smul.addr %s172, 8
      %s174 = scalar_lea.vmem %s0, %s173
      %p175 = pneg %p49
      %p176 = pneg %p46
      %p177 = pneg %p70
      %p178 = pneg %p67
      %p179 = pneg %p91
      %p180 = pneg %p88
      %p181 = pneg %p119
      %p182 = pneg %p116
      %p183 = scmp.lt.s32.totalorder %s18, 1
      %s184 = scalar_select %p183, %s18, 1
      %p185 = scmp.lt.s32.totalorder %s19, 0
      %s186 = scalar_select %p185, %s19, 0
      %s187 = smul.addr %s184, 8
      %s188 = sadd.s32 %s186, %s187
      %s189 = smul.addr %s188, 8
      %s190 = scalar_lea.vmem %s3, %s189
      %s191 = smul.u32 16, %s19
      %p192 = scmp.lt.s32.totalorder %s18, 1
      %s193 = scalar_select %p192, %s18, 1
      %p194 = scmp.lt.s32.totalorder %s191, 15
      %s195 = scalar_select %p194, %s191, 15
      %s196 = smul.addr %s195, 2
      %s197 = smul.addr %s193, 32
      %s198 = sadd.s32 %s196, %s197
      %s199 = smul.addr %s198, 8
      %s200 = scalar_lea.vmem %s0, %s199
      %s201 = smul.u32 16, %s19
      %p202 = scmp.lt.s32.totalorder %s18, 1
      %s203 = scalar_select %p202, %s18, 1
      %p204 = scmp.lt.s32.totalorder %s19, 0
      %s205 = scalar_select %p204, %s19, 0
      %s206 = smul.addr %s203, 8
      %s207 = sadd.s32 %s205, %s206
      %s208 = smul.addr %s207, 8
      %s209 = scalar_lea.vmem %s3, %s208
      %v210 = vld [vmem:[%s200] sm:$0xff]
      %v211 = vld [vmem:[%s200 + $0x8] sm:$0xff]
      %v212 = vld [vmem:[%s200 + $0x10] sm:$0xff]
      %v213 = vld [vmem:[%s200 + $0x18] sm:$0xff]
      %v214 = vld [vmem:[%s200 + $0x20] sm:$0xff]
      %v215 = vld [vmem:[%s200 + $0x28] sm:$0xff]
      %v216 = vld [vmem:[%s200 + $0x30] sm:$0xff]
      %v217 = vld [vmem:[%s200 + $0x38] sm:$0xff]
      %v218 = vld [vmem:[%s200 + $0x40] sm:$0xff]
      %v219 = vld [vmem:[%s200 + $0x48] sm:$0xff]
      %v220 = vld [vmem:[%s200 + $0x50] sm:$0xff]
      %v221 = vld [vmem:[%s200 + $0x58] sm:$0xff]
      %v222 = vld [vmem:[%s200 + $0x60] sm:$0xff]
      %v223 = vld [vmem:[%s200 + $0x68] sm:$0xff]
      %v224 = vld [vmem:[%s200 + $0x70] sm:$0xff]
      %v225 = vld [vmem:[%s200 + $0x78] sm:$0xff]
      %v226 = vld [vmem:[%s200 + $0x80] sm:$0xff]
      %v227 = vld [vmem:[%s200 + $0x88] sm:$0xff]
      %v228 = vld [vmem:[%s200 + $0x90] sm:$0xff]
      %v229 = vld [vmem:[%s200 + $0x98] sm:$0xff]
      %v230 = vld [vmem:[%s200 + $0xa0] sm:$0xff]
      %v231 = vld [vmem:[%s200 + $0xa8] sm:$0xff]
      %v232 = vld [vmem:[%s200 + $0xb0] sm:$0xff]
      %v233 = vld [vmem:[%s200 + $0xb8] sm:$0xff]
      %v234 = vld [vmem:[%s200 + $0xc0] sm:$0xff]
      %v235 = vld [vmem:[%s200 + $0xc8] sm:$0xff]
      %v236 = vld [vmem:[%s200 + $0xd0] sm:$0xff]
      %v237 = vld [vmem:[%s200 + $0xd8] sm:$0xff]
      %v238 = vld [vmem:[%s200 + $0xe0] sm:$0xff]
      %v239 = vld [vmem:[%s200 + $0xe8] sm:$0xff]
      %v240 = vld [vmem:[%s200 + $0xf0] sm:$0xff]
      %v241 = vld [vmem:[%s200 + $0xf8] sm:$0xff]
      %v242 = vld [vmem:[%s1] sm:$0xff]
      %v243 = vld [vmem:[%s1 + $0x8] sm:$0xff]
      %v244 = vld [vmem:[%s1 + $0x10] sm:$0xff]
      %v245 = vld [vmem:[%s1 + $0x18] sm:$0xff]
      %v246 = vld [vmem:[%s1 + $0x20] sm:$0xff]
      %v247 = vld [vmem:[%s1 + $0x28] sm:$0xff]
      %v248 = vld [vmem:[%s1 + $0x30] sm:$0xff]
      %v249 = vld [vmem:[%s1 + $0x38] sm:$0xff]
      %v250 = vld [vmem:[%s1 + $0x40] sm:$0xff]
      %v251 = vld [vmem:[%s1 + $0x48] sm:$0xff]
      %v252 = vld [vmem:[%s1 + $0x50] sm:$0xff]
      %v253 = vld [vmem:[%s1 + $0x58] sm:$0xff]
      %v254 = vld [vmem:[%s1 + $0x60] sm:$0xff]
      %v255 = vld [vmem:[%s1 + $0x68] sm:$0xff]
      %v256 = vld [vmem:[%s1 + $0x70] sm:$0xff]
      %v257 = vld [vmem:[%s1 + $0x78] sm:$0xff]
      %v258 = vld [vmem:[%s1 + $0x80] sm:$0xff]
      %v259 = vld [vmem:[%s1 + $0x88] sm:$0xff]
      %v260 = vld [vmem:[%s1 + $0x90] sm:$0x7]
      %v261 = vld [vmem:[%s2] sm:$0x1]
      %v262 = vlaneseq
      %v263 = vshrl.u32 %v262, 7
      %v264 = vsub.s32 0, %v263
      %v265 = vrot.slane %v261, %v264
      %vm266 = vcmask 154624
      %v268 = vsel %vm266, %v211, 0
      %v271 = vsel %vm266, %v213, 0
      %v274 = vsel %vm266, %v215, 0
      %v277 = vsel %vm266, %v217, 0
      %v280 = vsel %vm266, %v219, 0
      %v283 = vsel %vm266, %v221, 0
      %v286 = vsel %vm266, %v223, 0
      %v289 = vsel %vm266, %v225, 0
      %v292 = vsel %vm266, %v227, 0
      %v295 = vsel %vm266, %v229, 0
      %v298 = vsel %vm266, %v231, 0
      %v301 = vsel %vm266, %v233, 0
      %v304 = vsel %vm266, %v235, 0
      %v307 = vsel %vm266, %v237, 0
      %v310 = vsel %vm266, %v239, 0
      %v313 = vsel %vm266, %v241, 0
      %vm315 = vcmask 1042432
      %v317 = vsel %vm315, %v260, 0
      %319 = vmatprep.subr.mxu0 0.0
      %320 = vmatpush1.msra.mxu0 %v257
      %321 = vmatprep.subr.mxu0 0.0
      %322 = vmatpush1.msra.mxu0 %v256
      %323 = vmatprep.subr.mxu0 0.0
      %324 = vmatpush1.msra.mxu0 %v255
      %325 = vmatprep.subr.mxu0 0.0
      %326 = vmatpush1.msra.mxu0 %v254
      %327 = vmatprep.subr.mxu0 0.0
      %328 = vmatpush1.msra.mxu0 %v253
      %329 = vmatprep.subr.mxu0 0.0
      %330 = vmatpush1.msra.mxu0 %v252
      %331 = vmatprep.subr.mxu0 0.0
      %332 = vmatpush1.msra.mxu0 %v251
      %333 = vmatprep.subr.mxu0 0.0
      %334 = vmatpush1.msra.mxu0 %v250
      %335 = vmatprep.subr.mxu0 0.0
      %336 = vmatpush1.msra.mxu0 %v249
      %337 = vmatprep.subr.mxu0 0.0
      %338 = vmatpush1.msra.mxu0 %v248
      %339 = vmatprep.subr.mxu0 0.0
      %340 = vmatpush1.msra.mxu0 %v247
      %341 = vmatprep.subr.mxu0 0.0
      %342 = vmatpush1.msra.mxu0 %v246
      %343 = vmatprep.subr.mxu0 0.0
      %344 = vmatpush1.msra.mxu0 %v245
      %345 = vmatprep.subr.mxu0 0.0
      %346 = vmatpush1.msra.mxu0 %v244
      %347 = vmatprep.subr.mxu0 0.0
      %348 = vmatpush1.msra.mxu0 %v243
      %349 = vmatprep.subr.mxu0 0.0
      %350 = vmatpush1.msra.mxu0 %v242
      %351 = vmatprep.subr.mxu0 0.0
      %352 = vmatpush2.msra.mxu0 0.0
      %353 = vmatprep.subr.mxu0 0.0
      %354 = vmatpush2.msra.mxu0 0.0
      %355 = vmatprep.subr.mxu0 0.0
      %356 = vmatpush2.msra.mxu0 0.0
      %357 = vmatprep.subr.mxu0 0.0
      %358 = vmatpush2.msra.mxu0 0.0
      %359 = vmatprep.subr.mxu0 0.0
      %360 = vmatpush2.msra.mxu0 0.0
      %361 = vmatprep.subr.mxu0 0.0
      %362 = vmatpush2.msra.mxu0 0.0
      %363 = vmatprep.subr.mxu0 0.0
      %364 = vmatpush2.msra.mxu0 0.0
      %365 = vmatprep.subr.mxu0 0.0
      %366 = vmatpush2.msra.mxu0 0.0
      %367 = vmatprep.subr.mxu0 0.0
      %368 = vmatpush2.msra.mxu0 0.0
      %369 = vmatprep.subr.mxu0 0.0
      %370 = vmatpush2.msra.mxu0 0.0
      %371 = vmatprep.subr.mxu0 0.0
      %372 = vmatpush2.msra.mxu0 0.0
      %373 = vmatprep.subr.mxu0 0.0
      %374 = vmatpush2.msra.mxu0 0.0
      %375 = vmatprep.subr.mxu0 0.0
      %376 = vmatpush2.msra.mxu0 0.0
      %377 = vmatprep.subr.mxu0 0.0
      %378 = vmatpush2.msra.mxu0 %v317
      %379 = vmatprep.subr.mxu0 0.0
      %380 = vmatpush2.msra.mxu0 %v259
      %381 = vmatprep.subr.mxu0 0.0
      %382 = vmatpush2.msra.mxu0 %v258
      %383 = vmatprep.mubr.f32.mxu0 %v268
      %384 = vmatmul.mubr.f32.gmra.mxu0 %v210
      %v385 = vpop.f32.mrf.mxu0
      %v386 = vadd.f32 %v265, %v385
      %v387 = vpop.f32.mrf.mxu0
      %388 = vmatprep.mubr.f32.mxu0 %v271
      %389 = vmatmul.mubr.f32.gmra.mxu0 %v212
      %v390 = vpop.f32.mrf.mxu0
      %v391 = vadd.f32 %v265, %v390
      %v392 = vpop.f32.mrf.mxu0
      %393 = vmatprep.mubr.f32.mxu0 %v274
      %394 = vmatmul.mubr.f32.gmra.mxu0 %v214
      %v395 = vpop.f32.mrf.mxu0
      %v396 = vadd.f32 %v265, %v395
      %v397 = vpop.f32.mrf.mxu0
      %398 = vmatprep.mubr.f32.mxu0 %v277
      %399 = vmatmul.mubr.f32.gmra.mxu0 %v216
      %v400 = vpop.f32.mrf.mxu0
      %v401 = vadd.f32 %v265, %v400
      %v402 = vpop.f32.mrf.mxu0
      %403 = vmatprep.mubr.f32.mxu0 %v280
      %404 = vmatmul.mubr.f32.gmra.mxu0 %v218
      %v405 = vpop.f32.mrf.mxu0
      %v406 = vadd.f32 %v265, %v405
      %v407 = vpop.f32.mrf.mxu0
      %408 = vmatprep.mubr.f32.mxu0 %v283
      %409 = vmatmul.mubr.f32.gmra.mxu0 %v220
      %v410 = vpop.f32.mrf.mxu0
      %v411 = vadd.f32 %v265, %v410
      %v412 = vpop.f32.mrf.mxu0
      %413 = vmatprep.mubr.f32.mxu0 %v286
      %414 = vmatmul.mubr.f32.gmra.mxu0 %v222
      %v415 = vpop.f32.mrf.mxu0
      %v416 = vadd.f32 %v265, %v415
      %v417 = vpop.f32.mrf.mxu0
      %418 = vmatprep.mubr.f32.mxu0 %v289
      %419 = vmatmul.mubr.f32.gmra.mxu0 %v224
      %v420 = vpop.f32.mrf.mxu0
      %v421 = vadd.f32 %v265, %v420
      %v422 = vpop.f32.mrf.mxu0
      %423 = vmatprep.mubr.f32.mxu0 %v292
      %424 = vmatmul.mubr.f32.gmra.mxu0 %v226
      %v425 = vpop.f32.mrf.mxu0
      %v426 = vadd.f32 %v265, %v425
      %v427 = vpop.f32.mrf.mxu0
      %428 = vmatprep.mubr.f32.mxu0 %v295
      %429 = vmatmul.mubr.f32.gmra.mxu0 %v228
      %v430 = vpop.f32.mrf.mxu0
      %v431 = vadd.f32 %v265, %v430
      %v432 = vpop.f32.mrf.mxu0
      %433 = vmatprep.mubr.f32.mxu0 %v298
      %434 = vmatmul.mubr.f32.gmra.mxu0 %v230
      %v435 = vpop.f32.mrf.mxu0
      %v436 = vadd.f32 %v265, %v435
      %v437 = vpop.f32.mrf.mxu0
      %438 = vmatprep.mubr.f32.mxu0 %v301
      %439 = vmatmul.mubr.f32.gmra.mxu0 %v232
      %v440 = vpop.f32.mrf.mxu0
      %v441 = vadd.f32 %v265, %v440
      %v442 = vpop.f32.mrf.mxu0
      %443 = vmatprep.mubr.f32.mxu0 %v304
      %444 = vmatmul.mubr.f32.gmra.mxu0 %v234
      %v445 = vpop.f32.mrf.mxu0
      %v446 = vadd.f32 %v265, %v445
      %v447 = vpop.f32.mrf.mxu0
      %448 = vmatprep.mubr.f32.mxu0 %v307
      %449 = vmatmul.mubr.f32.gmra.mxu0 %v236
      %v450 = vpop.f32.mrf.mxu0
      %v451 = vadd.f32 %v265, %v450
      %v452 = vpop.f32.mrf.mxu0
      %453 = vmatprep.mubr.f32.mxu0 %v310
      %454 = vmatmul.mubr.f32.gmra.mxu0 %v238
      %v455 = vpop.f32.mrf.mxu0
      %v456 = vadd.f32 %v265, %v455
      %v457 = vpop.f32.mrf.mxu0
      %458 = vmatprep.mubr.f32.mxu0 %v313
      %459 = vmatmul.mubr.f32.gmra.mxu0 %v240
      %v460 = vpop.f32.mrf.mxu0
      %v461 = vadd.f32 %v265, %v460
      %v462 = vpop.f32.mrf.mxu0
      %463 = vdwg.mxu0
      %v464 = vld [vmem:[%s2 + $0x3] sm:$0x1]
      %v465 = vlaneseq
      %v466 = vshrl.u32 %v465, 7
      %v467 = vsub.s32 0, %v466
      %v468 = vrot.slane %v464, %v467
      %v469 = vmul.f32 %v386, %v468
      %v470 = vmul.f32 %v391, %v468
      %v471 = vmul.f32 %v396, %v468
      %v472 = vmul.f32 %v401, %v468
      %v473 = vmul.f32 %v406, %v468
      %v474 = vmul.f32 %v411, %v468
      %v475 = vmul.f32 %v416, %v468
      %v476 = vmul.f32 %v421, %v468
      %v477 = vmul.f32 %v426, %v468
      %v478 = vmul.f32 %v431, %v468
      %v479 = vmul.f32 %v436, %v468
      %v480 = vmul.f32 %v441, %v468
      %v481 = vmul.f32 %v446, %v468
      %v482 = vmul.f32 %v451, %v468
      %v483 = vmul.f32 %v456, %v468
      %v484 = vmul.f32 %v461, %v468
      %485 = vadd.xlane.f32.xlu0 %v469
      %v486 = vpop.xlane.xlu0 %485
      %487 = vadd.xlane.f32.xlu0 %v470
      %v488 = vpop.xlane.xlu0 %487
      %489 = vadd.xlane.f32.xlu0 %v471
      %v490 = vpop.xlane.xlu0 %489
      %491 = vadd.xlane.f32.xlu0 %v472
      %v492 = vpop.xlane.xlu0 %491
      %493 = vadd.xlane.f32.xlu0 %v473
      %v494 = vpop.xlane.xlu0 %493
      %495 = vadd.xlane.f32.xlu0 %v474
      %v496 = vpop.xlane.xlu0 %495
      %497 = vadd.xlane.f32.xlu0 %v475
      %v498 = vpop.xlane.xlu0 %497
      %499 = vadd.xlane.f32.xlu0 %v476
      %v500 = vpop.xlane.xlu0 %499
      %501 = vadd.xlane.f32.xlu0 %v477
      %v502 = vpop.xlane.xlu0 %501
      %503 = vadd.xlane.f32.xlu0 %v478
      %v504 = vpop.xlane.xlu0 %503
      %505 = vadd.xlane.f32.xlu0 %v479
      %v506 = vpop.xlane.xlu0 %505
      %507 = vadd.xlane.f32.xlu0 %v480
      %v508 = vpop.xlane.xlu0 %507
      %509 = vadd.xlane.f32.xlu0 %v481
      %v510 = vpop.xlane.xlu0 %509
      %511 = vadd.xlane.f32.xlu0 %v482
      %v512 = vpop.xlane.xlu0 %511
      %513 = vadd.xlane.f32.xlu0 %v483
      %v514 = vpop.xlane.xlu0 %513
      %515 = vadd.xlane.f32.xlu0 %v484
      %v516 = vpop.xlane.xlu0 %515
      %v517 = vmul.f32 %v486, 0.015625
      %v518 = vmul.f32 %v488, 0.015625
      %v519 = vmul.f32 %v490, 0.015625
      %v520 = vmul.f32 %v492, 0.015625
      %v521 = vmul.f32 %v494, 0.015625
      %v522 = vmul.f32 %v496, 0.015625
      %v523 = vmul.f32 %v498, 0.015625
      %v524 = vmul.f32 %v500, 0.015625
      %v525 = vmul.f32 %v502, 0.015625
      %v526 = vmul.f32 %v504, 0.015625
      %v527 = vmul.f32 %v506, 0.015625
      %v528 = vmul.f32 %v508, 0.015625
      %v529 = vmul.f32 %v510, 0.015625
      %v530 = vmul.f32 %v512, 0.015625
      %v531 = vmul.f32 %v514, 0.015625
      %v532 = vmul.f32 %v516, 0.015625
      %v533 = vsub.f32 %v386, %v517
      %v534 = vsub.f32 %v391, %v518
      %v535 = vsub.f32 %v396, %v519
      %v536 = vsub.f32 %v401, %v520
      %v537 = vsub.f32 %v406, %v521
      %v538 = vsub.f32 %v411, %v522
      %v539 = vsub.f32 %v416, %v523
      %v540 = vsub.f32 %v421, %v524
      %v541 = vsub.f32 %v426, %v525
      %v542 = vsub.f32 %v431, %v526
      %v543 = vsub.f32 %v436, %v527
      %v544 = vsub.f32 %v441, %v528
      %v545 = vsub.f32 %v446, %v529
      %v546 = vsub.f32 %v451, %v530
      %v547 = vsub.f32 %v456, %v531
      %v548 = vsub.f32 %v461, %v532
      %v549 = vmul.f32 %v533, %v468
      %v550 = vmul.f32 %v534, %v468
      %v551 = vmul.f32 %v535, %v468
      %v552 = vmul.f32 %v536, %v468
      %v553 = vmul.f32 %v537, %v468
      %v554 = vmul.f32 %v538, %v468
      %v555 = vmul.f32 %v539, %v468
      %v556 = vmul.f32 %v540, %v468
      %v557 = vmul.f32 %v541, %v468
      %v558 = vmul.f32 %v542, %v468
      %v559 = vmul.f32 %v543, %v468
      %v560 = vmul.f32 %v544, %v468
      %v561 = vmul.f32 %v545, %v468
      %v562 = vmul.f32 %v546, %v468
      %v563 = vmul.f32 %v547, %v468
      %v564 = vmul.f32 %v548, %v468
      %v565 = vmul.f32 %v549, %v549
      %v566 = vmul.f32 %v550, %v550
      %v567 = vmul.f32 %v551, %v551
      %v568 = vmul.f32 %v552, %v552
      %v569 = vmul.f32 %v553, %v553
      %v570 = vmul.f32 %v554, %v554
      %v571 = vmul.f32 %v555, %v555
      %v572 = vmul.f32 %v556, %v556
      %v573 = vmul.f32 %v557, %v557
      %v574 = vmul.f32 %v558, %v558
      %v575 = vmul.f32 %v559, %v559
      %v576 = vmul.f32 %v560, %v560
      %v577 = vmul.f32 %v561, %v561
      %v578 = vmul.f32 %v562, %v562
      %v579 = vmul.f32 %v563, %v563
      %v580 = vmul.f32 %v564, %v564
      %581 = vadd.xlane.f32.xlu0 %v565
      %v582 = vpop.xlane.xlu0 %581
      %583 = vadd.xlane.f32.xlu0 %v566
      %v584 = vpop.xlane.xlu0 %583
      %585 = vadd.xlane.f32.xlu0 %v567
      %v586 = vpop.xlane.xlu0 %585
      %587 = vadd.xlane.f32.xlu0 %v568
      %v588 = vpop.xlane.xlu0 %587
      %589 = vadd.xlane.f32.xlu0 %v569
      %v590 = vpop.xlane.xlu0 %589
      %591 = vadd.xlane.f32.xlu0 %v570
      %v592 = vpop.xlane.xlu0 %591
      %593 = vadd.xlane.f32.xlu0 %v571
      %v594 = vpop.xlane.xlu0 %593
      %595 = vadd.xlane.f32.xlu0 %v572
      %v596 = vpop.xlane.xlu0 %595
      %597 = vadd.xlane.f32.xlu0 %v573
      %v598 = vpop.xlane.xlu0 %597
      %599 = vadd.xlane.f32.xlu0 %v574
      %v600 = vpop.xlane.xlu0 %599
      %601 = vadd.xlane.f32.xlu0 %v575
      %v602 = vpop.xlane.xlu0 %601
      %603 = vadd.xlane.f32.xlu0 %v576
      %v604 = vpop.xlane.xlu0 %603
      %605 = vadd.xlane.f32.xlu0 %v577
      %v606 = vpop.xlane.xlu0 %605
      %607 = vadd.xlane.f32.xlu0 %v578
      %v608 = vpop.xlane.xlu0 %607
      %609 = vadd.xlane.f32.xlu0 %v579
      %v610 = vpop.xlane.xlu0 %609
      %611 = vadd.xlane.f32.xlu0 %v580
      %v612 = vpop.xlane.xlu0 %611
      %v613 = vmul.f32 %v582, 0.015625
      %v614 = vmul.f32 %v584, 0.015625
      %v615 = vmul.f32 %v586, 0.015625
      %v616 = vmul.f32 %v588, 0.015625
      %v617 = vmul.f32 %v590, 0.015625
      %v618 = vmul.f32 %v592, 0.015625
      %v619 = vmul.f32 %v594, 0.015625
      %v620 = vmul.f32 %v596, 0.015625
      %v621 = vmul.f32 %v598, 0.015625
      %v622 = vmul.f32 %v600, 0.015625
      %v623 = vmul.f32 %v602, 0.015625
      %v624 = vmul.f32 %v604, 0.015625
      %v625 = vmul.f32 %v606, 0.015625
      %v626 = vmul.f32 %v608, 0.015625
      %v627 = vmul.f32 %v610, 0.015625
      %v628 = vmul.f32 %v612, 0.015625
      %v629 = vadd.f32 %v613, 1e-05
      %v630 = vadd.f32 %v614, 1e-05
      %v631 = vadd.f32 %v615, 1e-05
      %v632 = vadd.f32 %v616, 1e-05
      %v633 = vadd.f32 %v617, 1e-05
      %v634 = vadd.f32 %v618, 1e-05
      %v635 = vadd.f32 %v619, 1e-05
      %v636 = vadd.f32 %v620, 1e-05
      %v637 = vadd.f32 %v621, 1e-05
      %v638 = vadd.f32 %v622, 1e-05
      %v639 = vadd.f32 %v623, 1e-05
      %v640 = vadd.f32 %v624, 1e-05
      %v641 = vadd.f32 %v625, 1e-05
      %v642 = vadd.f32 %v626, 1e-05
      %v643 = vadd.f32 %v627, 1e-05
      %v644 = vadd.f32 %v628, 1e-05
      %v645 = vrsqrt.pop %v629
      %v646 = vrsqrt.pop %v630
      %v647 = vrsqrt.pop %v631
      %v648 = vrsqrt.pop %v632
      %v649 = vrsqrt.pop %v633
      %v650 = vrsqrt.pop %v634
      %v651 = vrsqrt.pop %v635
      %v652 = vrsqrt.pop %v636
      %v653 = vrsqrt.pop %v637
      %v654 = vrsqrt.pop %v638
      %v655 = vrsqrt.pop %v639
      %v656 = vrsqrt.pop %v640
      %v657 = vrsqrt.pop %v641
      %v658 = vrsqrt.pop %v642
      %v659 = vrsqrt.pop %v643
      %v660 = vrsqrt.pop %v644
      %v661 = vmul.f32 %v549, %v645
      %v662 = vmul.f32 %v550, %v646
      %v663 = vmul.f32 %v551, %v647
      %v664 = vmul.f32 %v552, %v648
      %v665 = vmul.f32 %v553, %v649
      %v666 = vmul.f32 %v554, %v650
      %v667 = vmul.f32 %v555, %v651
      %v668 = vmul.f32 %v556, %v652
      %v669 = vmul.f32 %v557, %v653
      %v670 = vmul.f32 %v558, %v654
      %v671 = vmul.f32 %v559, %v655
      %v672 = vmul.f32 %v560, %v656
      %v673 = vmul.f32 %v561, %v657
      %v674 = vmul.f32 %v562, %v658
      %v675 = vmul.f32 %v563, %v659
      %v676 = vmul.f32 %v564, %v660
      %v677 = vld [vmem:[%s2 + $0x1] sm:$0x1]
      %v678 = vlaneseq
      %v679 = vshrl.u32 %v678, 7
      %v680 = vsub.s32 0, %v679
      %v681 = vrot.slane %v677, %v680
      %v682 = vmul.f32 %v661, %v681
      %v683 = vmul.f32 %v662, %v681
      %v684 = vmul.f32 %v663, %v681
      %v685 = vmul.f32 %v664, %v681
      %v686 = vmul.f32 %v665, %v681
      %v687 = vmul.f32 %v666, %v681
      %v688 = vmul.f32 %v667, %v681
      %v689 = vmul.f32 %v668, %v681
      %v690 = vmul.f32 %v669, %v681
      %v691 = vmul.f32 %v670, %v681
      %v692 = vmul.f32 %v671, %v681
      %v693 = vmul.f32 %v672, %v681
      %v694 = vmul.f32 %v673, %v681
      %v695 = vmul.f32 %v674, %v681
      %v696 = vmul.f32 %v675, %v681
      %v697 = vmul.f32 %v676, %v681
      %v698 = vld [vmem:[%s2 + $0x2] sm:$0x1]
      %v699 = vlaneseq
      %v700 = vshrl.u32 %v699, 7
      %v701 = vsub.s32 0, %v700
      %v702 = vrot.slane %v698, %v701
      %v703 = vadd.f32 %v682, %v702
      %v704 = vadd.f32 %v683, %v702
      %v705 = vadd.f32 %v684, %v702
      %v706 = vadd.f32 %v685, %v702
      %v707 = vadd.f32 %v686, %v702
      %v708 = vadd.f32 %v687, %v702
      %v709 = vadd.f32 %v688, %v702
      %v710 = vadd.f32 %v689, %v702
      %v711 = vadd.f32 %v690, %v702
      %v712 = vadd.f32 %v691, %v702
      %v713 = vadd.f32 %v692, %v702
      %v714 = vadd.f32 %v693, %v702
      %v715 = vadd.f32 %v694, %v702
      %v716 = vadd.f32 %v695, %v702
      %v717 = vadd.f32 %v696, %v702
      %v718 = vadd.f32 %v697, %v702
      %719 = vxpose.xlu0.b32.start [1/16] %v703, 128
      %720 = vxpose.xlu0.b32.cont [2/16] %v704, 128
      %721 = vxpose.xlu0.b32.cont [3/16] %v705, 128
      %722 = vxpose.xlu0.b32.cont [4/16] %v706, 128
      %723 = vxpose.xlu0.b32.cont [5/16] %v707, 128
      %724 = vxpose.xlu0.b32.cont [6/16] %v708, 128
      %725 = vxpose.xlu0.b32.cont [7/16] %v709, 128
      %726 = vxpose.xlu0.b32.cont [8/16] %v710, 128
      %727 = vxpose.xlu0.b32.cont [9/16] %v711, 128
      %728 = vxpose.xlu0.b32.cont [10/16] %v712, 128
      %729 = vxpose.xlu0.b32.cont [11/16] %v713, 128
      %730 = vxpose.xlu0.b32.cont [12/16] %v714, 128
      %731 = vxpose.xlu0.b32.cont [13/16] %v715, 128
      %732 = vxpose.xlu0.b32.cont [14/16] %v716, 128
      %733 = vxpose.xlu0.b32.cont [15/16] %v717, 128
      %734 = vxpose.xlu0.b32.end [16/16] %v718, 128
      %v735 = vpop.trf.xlu0
      %v736 = vpop.trf.xlu0
      %v737 = vpop.trf.xlu0
      %v738 = vpop.trf.xlu0
      %v739 = vpop.trf.xlu0
      %v740 = vpop.trf.xlu0
      %v741 = vpop.trf.xlu0
      %v742 = vpop.trf.xlu0
      %v743 = vpop.trf.xlu0
      %v744 = vpop.trf.xlu0
      %v745 = vpop.trf.xlu0
      %v746 = vpop.trf.xlu0
      %v747 = vpop.trf.xlu0
      %v748 = vpop.trf.xlu0
      %v749 = vpop.trf.xlu0
      %v750 = vpop.trf.xlu0
      %751 = vst [vmem:[%s209] sm:$0xff] %v735
      %752 = vst [vmem:[%s209 + $0x8] sm:$0xff] %v736
      %753 = vst [vmem:[%s209 + $0x10] sm:$0xff] %v737
      %754 = vst [vmem:[%s209 + $0x18] sm:$0xff] %v738
      %755 = vst [vmem:[%s209 + $0x20] sm:$0xff] %v739
      %756 = vst [vmem:[%s209 + $0x28] sm:$0xff] %v740
      %757 = vst [vmem:[%s209 + $0x30] sm:$0xff] %v741
      %758 = vst [vmem:[%s209 + $0x38] sm:$0xff] %v742
      %p759 = scmp.lt.s32.totalorder %s18, 1
      %s760 = scalar_select %p759, %s18, 1
      %p761 = scmp.lt.s32.totalorder %s19, 0
      %s762 = scalar_select %p761, %s19, 0
      %s763 = smul.addr %s760, 8
      %s764 = sadd.s32 %s762, %s763
      %s765 = smul.addr %s764, 8
      %s766 = scalar_lea.vmem %s3, %s765
      // Predicated region
      $region33: #{conv_embed.1} parent=31 // pred_check
        %p767 = pneg %p116
      $region34: #{conv_embed.1} parent=31 // pred_check_branch
        %769 = sbr.rel (%p767) target = $region36
      $region35: #{conv_embed.1} parent=31 // pred_region
        _
      $region36: #{conv_embed.1} parent=31 // pred_fallthru
        _
    $region32: #{conv_embed.1} parent=5 // pred_fallthru
      _
    %p770 = scmp.le.s32.totalorder 2, %s9
    // Predicated region
    $region37: #{conv_embed.1} parent=5 // pred_check
      %p771 = pneg %p770
    $region38: #{conv_embed.1} parent=5 // pred_check_branch
      %773 = sbr.rel (%p771) target = $region40
    $region39: #{conv_embed.1} parent=5 // pred_region
      %s774 = ssub.s32 %s9, 2
      // Predicated region
      $region41: #{conv_embed.1} parent=39 // pred_check
        %p775 = pneg %p122
      $region42: #{conv_embed.1} parent=39 // pred_check_branch
        %777 = sbr.rel (%p775) target = $region44
      $region43: #{conv_embed.1} parent=39 // pred_region
        %p778 = scmp.lt.s32.totalorder %s20, 1
        %s779 = scalar_select %p778, %s20, 1
        %p780 = scmp.lt.s32.totalorder %s21, 0
        %s781 = scalar_select %p780, %s21, 0
        %s782 = smul.addr %s779, 8
        %s783 = sadd.s32 %s781, %s782
        %s784 = smul.addr %s783, 8
        %s785 = scalar_lea.vmem %s3, %s784
      $region44: #{conv_embed.1} parent=39 // pred_fallthru
        _
    $region40: #{conv_embed.1} parent=5 // pred_fallthru
      _
  $region6: #{conv_embed.1} parent=0 // loop_footer
    %s13 = sadd.s32 1, %s9
  $region7: #{conv_embed.1} parent=0 // loop_footer_branch
    %8 = sbr.rel target = $region3
  $region8: #{conv_embed.1} parent=0 // loop_exit
    _

</llo_original>
